<compile_context>
chip_gen: v5e
topology: v5e:2x2
jax: 0.10.0
libtpu: 0.0.40
codegen_flags: <defaults>
</compile_context>

<pallas_src>
import functools

import jax
import jax.numpy as jnp
import numpy as np
from jax.experimental import pallas as pl
from jax.experimental.pallas import tpu as pltpu


def _conv3x3_bn_kernel(x_ref, w_ref, scale_ref, bias_ref, o_ref, patch_ref,
                       *, s, cin, wr, l_out):
    """One batch element: in-VMEM im2col + single MXU matmul + folded BatchNorm.

    x_ref     : (1, s*s, Cin, L_in)  stride-phase decomposed, zero-extended image
    w_ref     : (Cout, 9*Cin)        conv weight, tap-major (kh, kw, ci)
    scale_ref : (Cout, 1) f32        gamma / sqrt(var + eps)
    bias_ref  : (Cout, 1) f32        beta - mean * scale
    o_ref     : (1, Cout, L_out)     L_out = Ho * Wr  (cols >= Wo are junk, cropped outside)
    patch_ref : (9*Cin, L_out)       VMEM scratch in the compute dtype
    """
    # Build the im2col patch matrix in VMEM.  Because the input was decomposed into its
    # stride phases, every 3x3 tap is a contiguous slice with a *static* offset: no strided
    # or dynamic lane access, no reshapes/relayouts.
    for kh in range(3):
        for kw in range(3):
            phase = (kh % s) * s + (kw % s)          # which stride phase holds this tap
            off = (kh // s) * wr + (kw // s)         # static flat offset inside the phase
            k = kh * 3 + kw
            patch_ref[k * cin:(k + 1) * cin, :] = x_ref[0, phase, :, off:off + l_out]

    # Single matmul on the MXU (K = 9*Cin), f32 accumulation.  Output is (Cout, L_out):
    # channels on sublanes, flattened space on lanes -> lane-dense stores, NCHW for free.
    acc = jnp.dot(w_ref[...], patch_ref[...], preferred_element_type=jnp.float32)
    o_ref[0] = (acc * scale_ref[...] + bias_ref[...]).astype(o_ref.dtype)


def firstconv3x3_forward(x, weight, gamma, beta, running_mean, running_var,
                         stride=2, eps=1e-5, compute_dtype=jnp.bfloat16):
    """x: (N, Cin, H, W) NCHW float32.  weight: (Cout, Cin, 3, 3).  Returns NCHW float32."""
    N, Cin, H, W = x.shape
    Cout = weight.shape[0]
    s = int(stride)
    Ho = (H + 2 - 3) // s + 1
    Wo = (W + 2 - 3) // s + 1
    D = 2 // s                            # max tap shift (kh//s, kw//s) inside the phase grid
    Hr = Ho + D + (1 if D > 0 else 0)     # phase-image rows (+1 slack row for flat-slice tail)
    Wr = Wo + D                           # phase-image cols (output cols >= Wo are junk)
    L_in, L_out = Hr * Wr, Ho * Wr
    PH, K9 = s * s, 9 * Cin

    # ---- single fused prep pass: conv pad-1 + zero-extend + space-to-depth (stride phases) ----
    Hp, Wp = Hr * s, Wr * s
    x_pad = jnp.pad(x, ((0, 0), (0, 0),
                        (1, max(0, Hp - H - 1)), (1, max(0, Wp - W - 1))))
    x_pad = x_pad[:, :, :Hp, :Wp]                                   # no-op unless stride >= 3
    # x_ph[n, ph*s+pw, ci, a*Wr + b] == x_pad[n, ci, a*s+ph, b*s+pw]
    x_ph = x_pad.reshape(N, Cin, Hr, s, Wr, s)
    x_ph = x_ph.transpose(0, 3, 5, 1, 2, 4).reshape(N, PH, Cin, L_in)
    x_ph = x_ph.astype(compute_dtype)

    # weight -> (Cout, kh, kw, ci) -> (Cout, 9*Cin), matching the patch row order above
    w2 = jnp.transpose(weight, (0, 2, 3, 1)).reshape(Cout, K9).astype(compute_dtype)

    # fold BatchNorm (inference) into an f32 scale/shift epilogue
    scale = (gamma / jnp.sqrt(running_var + eps)).astype(jnp.float32)
    bias = (beta - running_mean * scale).astype(jnp.float32)
    scale2 = scale.reshape(Cout, 1)
    bias2 = bias.reshape(Cout, 1)

    kernel = functools.partial(_conv3x3_bn_kernel, s=s, cin=Cin, wr=Wr, l_out=L_out)

    itemsize = jnp.dtype(compute_dtype).itemsize
    cost = pl.CostEstimate(
        flops=2 * N * Cout * K9 * L_out,
        transcendentals=0,
        bytes_accessed=(x_ph.size * itemsize + w2.size * itemsize
                        + (scale2.size + bias2.size) * 4 + N * Cout * L_out * 4))

    out_flat = pl.pallas_call(
        kernel,
        out_shape=jax.ShapeDtypeStruct((N, Cout, L_out), jnp.float32),
        grid_spec=pltpu.PrefetchScalarGridSpec(
            num_scalar_prefetch=0,
            grid=(N,),
            in_specs=[
                pl.BlockSpec((1, PH, Cin, L_in), lambda n: (n, 0, 0, 0)),
                pl.BlockSpec((Cout, K9), lambda n: (0, 0)),
                pl.BlockSpec((Cout, 1), lambda n: (0, 0)),
                pl.BlockSpec((Cout, 1), lambda n: (0, 0)),
            ],
            out_specs=pl.BlockSpec((1, Cout, L_out), lambda n: (n, 0, 0)),
            scratch_shapes=[pltpu.VMEM((K9, L_out), compute_dtype)],
        ),
        compiler_params=pltpu.CompilerParams(
            dimension_semantics=("parallel",),
            vmem_limit_bytes=32 * 1024 * 1024),
        cost_estimate=cost,
    )(x_ph, w2, scale2, bias2)

    # Result is already NCHW: metadata reshape + right-edge crop only (no transpose pass).
    out = out_flat.reshape(N, Cout, Ho, Wr)[:, :, :, :Wo]
    return out


def _reference(x, weight, gamma, beta, running_mean, running_var, stride, eps=1e-5):
    conv = jax.lax.conv_general_dilated(
        x, weight, window_strides=(stride, stride), padding=((1, 1), (1, 1)),
        dimension_numbers=("NCHW", "OIHW", "NCHW"))
    scale = gamma / jnp.sqrt(running_var + eps)
    bias = beta - running_mean * scale
    return conv * scale[None, :, None, None] + bias[None, :, None, None]


if __name__ == "__main__":
    # small shapes consistent with the module: inp=4, oup=8, stride=2
    N, Cin, H, W = 2, 4, 16, 16
    Cout, stride = 8, 2

    key = jax.random.PRNGKey(0)
    k_x, k_w, k_g, k_b, k_m, k_v = jax.random.split(key, 6)

    x = jax.random.normal(k_x, (N, Cin, H, W), dtype=jnp.float32)
    weight = jax.random.normal(k_w, (Cout, Cin, 3, 3), dtype=jnp.float32) * 0.1
    gamma = jax.random.normal(k_g, (Cout,), dtype=jnp.float32) * 0.1 + 1.0
    beta = jax.random.normal(k_b, (Cout,), dtype=jnp.float32) * 0.1
    running_mean = jax.random.normal(k_m, (Cout,), dtype=jnp.float32) * 0.1
    running_var = jax.random.uniform(k_v, (Cout,), dtype=jnp.float32,
                                     minval=0.5, maxval=1.5)

    ref = _reference(x, weight, gamma, beta, running_mean, running_var, stride)

    # Exact-math check: f32 operands through the same kernel.
    out_f32 = firstconv3x3_forward(x, weight, gamma, beta, running_mean,
                                   running_var, stride=stride,
                                   compute_dtype=jnp.float32)
    out_f32 = jax.block_until_ready(out_f32)
    np.testing.assert_allclose(np.asarray(out_f32), np.asarray(ref),
                               rtol=1e-4, atol=1e-4)
    assert out_f32.shape == (N, Cout, H // stride, W // stride)

    # Default fast path: bf16 operands into the MXU, f32 accumulation + f32 BN epilogue.
    out_bf16 = firstconv3x3_forward(x, weight, gamma, beta, running_mean,
                                    running_var, stride=stride)
    out_bf16 = jax.block_until_ready(out_bf16)
    np.testing.assert_allclose(np.asarray(out_bf16), np.asarray(ref),
                               rtol=5e-2, atol=5e-2)
    assert out_bf16.shape == (N, Cout, H // stride, W // stride)

    print("KERNEL_OK")
</pallas_src>

<mosaic_0001>
module attributes {stable_mosaic.version = 11 : i64} {
  func.func @_conv3x3_bn_kernel(%arg0: i32, %arg1: memref<1x4x4x90xf32, #tpu.memory_space<vmem>>, %arg2: memref<8x36xf32, #tpu.memory_space<vmem>>, %arg3: memref<8x1xf32, #tpu.memory_space<vmem>>, %arg4: memref<8x1xf32, #tpu.memory_space<vmem>>, %arg5: memref<1x8x72xf32, #tpu.memory_space<vmem>>, %arg6: memref<36x72xf32, #tpu.memory_space<vmem>>) attributes {dimension_semantics = [#tpu.dimension_semantics<parallel>], iteration_bounds = array<i64: 2>, scalar_prefetch = 0 : i64, scratch_operands = 1 : i64, tpu.core_type = #tpu.core_type<tc>, window_params = [{transform_indices = @transform_0, window_bounds = array<i64: 1, 4, 4, 90>}, {pipeline_mode = #tpu.pipeline_mode<synchronous>, transform_indices = @transform_1, window_bounds = array<i64: 8, 36>}, {pipeline_mode = #tpu.pipeline_mode<synchronous>, transform_indices = @transform_2, window_bounds = array<i64: 8, 1>}, {pipeline_mode = #tpu.pipeline_mode<synchronous>, transform_indices = @transform_3, window_bounds = array<i64: 8, 1>}, {transform_indices = @transform_4, window_bounds = array<i64: 1, 8, 72>}]} {
    %c0 = arith.constant 0 : index
    %c0_0 = arith.constant 0 : index
    %c0_1 = arith.constant 0 : index
    %c0_2 = arith.constant 0 : index
    %0 = vector.load %arg1[%c0, %c0_0, %c0_1, %c0_2] : memref<1x4x4x90xf32, #tpu.memory_space<vmem>>, vector<1x1x4x72xf32>
    %1 = vector.shape_cast %0 : vector<1x1x4x72xf32> to vector<4x72xf32>
    %c0_3 = arith.constant 0 : index
    %c0_4 = arith.constant 0 : index
    %2 = vector.load %arg6[%c0_3, %c0_4] : memref<36x72xf32, #tpu.memory_space<vmem>>, vector<4x72xf32>
    tpu.vector_store %arg6[%c0_3, %c0_4], %1 {strides = array<i32>} : memref<36x72xf32, #tpu.memory_space<vmem>>, vector<4x72xf32>,
    %c0_5 = arith.constant 0 : index
    %c1 = arith.constant 1 : index
    %c0_6 = arith.constant 0 : index
    %c0_7 = arith.constant 0 : index
    %3 = vector.load %arg1[%c0_5, %c1, %c0_6, %c0_7] : memref<1x4x4x90xf32, #tpu.memory_space<vmem>>, vector<1x1x4x72xf32>
    %4 = vector.shape_cast %3 : vector<1x1x4x72xf32> to vector<4x72xf32>
    %c4 = arith.constant 4 : index
    %c0_8 = arith.constant 0 : index
    %5 = vector.load %arg6[%c4, %c0_8] : memref<36x72xf32, #tpu.memory_space<vmem>>, vector<4x72xf32>
    tpu.vector_store %arg6[%c4, %c0_8], %4 {strides = array<i32>} : memref<36x72xf32, #tpu.memory_space<vmem>>, vector<4x72xf32>,
    %c0_9 = arith.constant 0 : index
    %c0_10 = arith.constant 0 : index
    %c0_11 = arith.constant 0 : index
    %c1_12 = arith.constant 1 : index
    %6 = vector.load %arg1[%c0_9, %c0_10, %c0_11, %c1_12] : memref<1x4x4x90xf32, #tpu.memory_space<vmem>>, vector<1x1x4x72xf32>
    %7 = vector.shape_cast %6 : vector<1x1x4x72xf32> to vector<4x72xf32>
    %c8 = arith.constant 8 : index
    %c0_13 = arith.constant 0 : index
    %8 = vector.load %arg6[%c8, %c0_13] : memref<36x72xf32, #tpu.memory_space<vmem>>, vector<4x72xf32>
    tpu.vector_store %arg6[%c8, %c0_13], %7 {strides = array<i32>} : memref<36x72xf32, #tpu.memory_space<vmem>>, vector<4x72xf32>,
    %c0_14 = arith.constant 0 : index
    %c2 = arith.constant 2 : index
    %c0_15 = arith.constant 0 : index
    %c0_16 = arith.constant 0 : index
    %9 = vector.load %arg1[%c0_14, %c2, %c0_15, %c0_16] : memref<1x4x4x90xf32, #tpu.memory_space<vmem>>, vector<1x1x4x72xf32>
    %10 = vector.shape_cast %9 : vector<1x1x4x72xf32> to vector<4x72xf32>
    %c12 = arith.constant 12 : index
    %c0_17 = arith.constant 0 : index
    %11 = vector.load %arg6[%c12, %c0_17] : memref<36x72xf32, #tpu.memory_space<vmem>>, vector<4x72xf32>
    tpu.vector_store %arg6[%c12, %c0_17], %10 {strides = array<i32>} : memref<36x72xf32, #tpu.memory_space<vmem>>, vector<4x72xf32>,
    %c0_18 = arith.constant 0 : index
    %c3 = arith.constant 3 : index
    %c0_19 = arith.constant 0 : index
    %c0_20 = arith.constant 0 : index
    %12 = vector.load %arg1[%c0_18, %c3, %c0_19, %c0_20] : memref<1x4x4x90xf32, #tpu.memory_space<vmem>>, vector<1x1x4x72xf32>
    %13 = vector.shape_cast %12 : vector<1x1x4x72xf32> to vector<4x72xf32>
    %c16 = arith.constant 16 : index
    %c0_21 = arith.constant 0 : index
    %14 = vector.load %arg6[%c16, %c0_21] : memref<36x72xf32, #tpu.memory_space<vmem>>, vector<4x72xf32>
    tpu.vector_store %arg6[%c16, %c0_21], %13 {strides = array<i32>} : memref<36x72xf32, #tpu.memory_space<vmem>>, vector<4x72xf32>,
    %c0_22 = arith.constant 0 : index
    %c2_23 = arith.constant 2 : index
    %c0_24 = arith.constant 0 : index
    %c1_25 = arith.constant 1 : index
    %15 = vector.load %arg1[%c0_22, %c2_23, %c0_24, %c1_25] : memref<1x4x4x90xf32, #tpu.memory_space<vmem>>, vector<1x1x4x72xf32>
    %16 = vector.shape_cast %15 : vector<1x1x4x72xf32> to vector<4x72xf32>
    %c20 = arith.constant 20 : index
    %c0_26 = arith.constant 0 : index
    %17 = vector.load %arg6[%c20, %c0_26] : memref<36x72xf32, #tpu.memory_space<vmem>>, vector<4x72xf32>
    tpu.vector_store %arg6[%c20, %c0_26], %16 {strides = array<i32>} : memref<36x72xf32, #tpu.memory_space<vmem>>, vector<4x72xf32>,
    %c0_27 = arith.constant 0 : index
    %c0_28 = arith.constant 0 : index
    %c0_29 = arith.constant 0 : index
    %c9 = arith.constant 9 : index
    %18 = vector.load %arg1[%c0_27, %c0_28, %c0_29, %c9] : memref<1x4x4x90xf32, #tpu.memory_space<vmem>>, vector<1x1x4x72xf32>
    %19 = vector.shape_cast %18 : vector<1x1x4x72xf32> to vector<4x72xf32>
    %c24 = arith.constant 24 : index
    %c0_30 = arith.constant 0 : index
    %20 = vector.load %arg6[%c24, %c0_30] : memref<36x72xf32, #tpu.memory_space<vmem>>, vector<4x72xf32>
    tpu.vector_store %arg6[%c24, %c0_30], %19 {strides = array<i32>} : memref<36x72xf32, #tpu.memory_space<vmem>>, vector<4x72xf32>,
    %c0_31 = arith.constant 0 : index
    %c1_32 = arith.constant 1 : index
    %c0_33 = arith.constant 0 : index
    %c9_34 = arith.constant 9 : index
    %21 = vector.load %arg1[%c0_31, %c1_32, %c0_33, %c9_34] : memref<1x4x4x90xf32, #tpu.memory_space<vmem>>, vector<1x1x4x72xf32>
    %22 = vector.shape_cast %21 : vector<1x1x4x72xf32> to vector<4x72xf32>
    %c28 = arith.constant 28 : index
    %c0_35 = arith.constant 0 : index
    %23 = vector.load %arg6[%c28, %c0_35] : memref<36x72xf32, #tpu.memory_space<vmem>>, vector<4x72xf32>
    tpu.vector_store %arg6[%c28, %c0_35], %22 {strides = array<i32>} : memref<36x72xf32, #tpu.memory_space<vmem>>, vector<4x72xf32>,
    %c0_36 = arith.constant 0 : index
    %c0_37 = arith.constant 0 : index
    %c0_38 = arith.constant 0 : index
    %c10 = arith.constant 10 : index
    %24 = vector.load %arg1[%c0_36, %c0_37, %c0_38, %c10] : memref<1x4x4x90xf32, #tpu.memory_space<vmem>>, vector<1x1x4x72xf32>
    %25 = vector.shape_cast %24 : vector<1x1x4x72xf32> to vector<4x72xf32>
    %c32 = arith.constant 32 : index
    %c0_39 = arith.constant 0 : index
    %26 = vector.load %arg6[%c32, %c0_39] : memref<36x72xf32, #tpu.memory_space<vmem>>, vector<4x72xf32>
    tpu.vector_store %arg6[%c32, %c0_39], %25 {strides = array<i32>} : memref<36x72xf32, #tpu.memory_space<vmem>>, vector<4x72xf32>,
    %c0_40 = arith.constant 0 : index
    %c0_41 = arith.constant 0 : index
    %27 = vector.load %arg2[%c0_40, %c0_41] : memref<8x36xf32, #tpu.memory_space<vmem>>, vector<8x36xf32>
    %c0_42 = arith.constant 0 : index
    %c0_43 = arith.constant 0 : index
    %28 = vector.load %arg6[%c0_42, %c0_43] : memref<36x72xf32, #tpu.memory_space<vmem>>, vector<36x72xf32>
    %cst = arith.constant dense<0.000000e+00> : vector<8x72xf32>
    %29 = tpu.matmul %27, %28, %cst {dimension_numbers = #tpu.dot_dimension_numbers<[1], [0], [0], [1], [0, 0, 1, 1], [], []>} : vector<8x36xf32>, vector<36x72xf32>, vector<8x72xf32> -> vector<8x72xf32>
    %c0_44 = arith.constant 0 : index
    %c0_45 = arith.constant 0 : index
    %30 = vector.load %arg3[%c0_44, %c0_45] : memref<8x1xf32, #tpu.memory_space<vmem>>, vector<8x1xf32>
    %31 = vector.broadcast %30 : vector<8x1xf32> to vector<8x72xf32>
    %32 = arith.mulf %29, %31 : vector<8x72xf32>
    %c0_46 = arith.constant 0 : index
    %c0_47 = arith.constant 0 : index
    %33 = vector.load %arg4[%c0_46, %c0_47] : memref<8x1xf32, #tpu.memory_space<vmem>>, vector<8x1xf32>
    %34 = vector.broadcast %33 : vector<8x1xf32> to vector<8x72xf32>
    %35 = arith.addf %32, %34 : vector<8x72xf32>
    %c0_48 = arith.constant 0 : index
    %c0_49 = arith.constant 0 : index
    %c0_50 = arith.constant 0 : index
    %36 = vector.load %arg5[%c0_48, %c0_49, %c0_50] : memref<1x8x72xf32, #tpu.memory_space<vmem>>, vector<1x8x72xf32>
    %37 = vector.shape_cast %36 : vector<1x8x72xf32> to vector<8x72xf32>
    %38 = vector.shape_cast %35 : vector<8x72xf32> to vector<1x8x72xf32>
    tpu.vector_store %arg5[%c0_48, %c0_49, %c0_50], %38 {strides = array<i32>} : memref<1x8x72xf32, #tpu.memory_space<vmem>>, vector<1x8x72xf32>,
    return
  }
  func.func @transform_0(%arg0: i32) -> (i32, i32, i32, i32) {
    %c0_i32 = arith.constant 0 : i32
    %c0_i32_0 = arith.constant 0 : i32
    %c0_i32_1 = arith.constant 0 : i32
    %c0_i32_2 = arith.constant 0 : i32
    return %arg0, %c0_i32, %c0_i32_0, %c0_i32_1 : i32, i32, i32, i32
  }
  func.func @transform_1(%arg0: i32) -> (i32, i32) {
    %c0_i32 = arith.constant 0 : i32
    %c0_i32_0 = arith.constant 0 : i32
    %c0_i32_1 = arith.constant 0 : i32
    return %c0_i32, %c0_i32_0 : i32, i32
  }
  func.func @transform_2(%arg0: i32) -> (i32, i32) {
    %c0_i32 = arith.constant 0 : i32
    %c0_i32_0 = arith.constant 0 : i32
    %c0_i32_1 = arith.constant 0 : i32
    return %c0_i32, %c0_i32_0 : i32, i32
  }
  func.func @transform_3(%arg0: i32) -> (i32, i32) {
    %c0_i32 = arith.constant 0 : i32
    %c0_i32_0 = arith.constant 0 : i32
    %c0_i32_1 = arith.constant 0 : i32
    return %c0_i32, %c0_i32_0 : i32, i32
  }
  func.func @transform_4(%arg0: i32) -> (i32, i32, i32) {
    %c0_i32 = arith.constant 0 : i32
    %c0_i32_0 = arith.constant 0 : i32
    %c0_i32_1 = arith.constant 0 : i32
    return %arg0, %c0_i32, %c0_i32_0 : i32, i32, i32
  }
}

</mosaic_0001>

<llo_original>
// kernel: tpu_custom_call.1
$region0: #{tpu_custom_call.1}
  #allocation0 [shape = 'u32[]', space=smem, size = 0x4, offset = 0x4, fixed_abs, tag = 'smem constant byte address 0x4 - core index']
  #allocation1 [shape = 'u32[72,128]{1,0:T(1,128)}', space=vmem, size = 0x9000, scoped, tag = 'internal scratch']
  #allocation2 [shape = 'f32[36,72]{1,0:T(8,128)}', space=vmem, size = 0x5000, scoped, tag = 'scratch operand']
  %s0 = inlined_call_operand.hbm [shape: f32[2,4,4,90], index: 0, kind: input, shape index: {}]
  %s1 = inlined_call_operand.vmem [shape: f32[8,36], index: 1, kind: input, shape index: {}]
  %s2 = inlined_call_operand.vmem [shape: f32[8,1], index: 2, kind: input, shape index: {}]
  %s3 = inlined_call_operand.vmem [shape: f32[8,1], index: 3, kind: input, shape index: {}]
  %s4 = inlined_call_operand.hbm [shape: f32[2,8,72], index: 4, kind: output, shape index: {}]
  %s5 = sld [smem:[#allocation0]]
  $region53: #{tpu_custom_call.1} parent=0
    _
  %s7 = ssub.s32 1, %s5
  %s8 = scalar_select 0, %s7, %s5
  $region1: #{tpu_custom_call.1} parent=0
    #allocation3 [shape = 'u8[16384]{0}', space=vmem, size = 0x4000, scoped, tag = 'input window, operand 0']
    #allocation4 [shape = 's32[2]{0}', space=sflag, size = 0x8, scoped, tag = 'scoped memory for tpu_custom_call.1']
    #allocation5 [shape = 's32[2]{0}', space=sflag, size = 0x8, scoped, tag = 'scoped memory for tpu_custom_call.1']
    #allocation6 [shape = 'u8[8192]{0}', space=vmem, size = 0x2000, scoped, tag = 'output window, operand 0']
    %9 = vsyncpa [#allocation4], 0
    %s10 = scalar_lea.sflag [#allocation4], 1
    %11 = vsyncpa %s10, 0
    %12 = vsyncpa [#allocation5], 0
    %s13 = scalar_lea.sflag [#allocation5], 1
    %14 = vsyncpa %s13, 0
    loop: start=0, step=1, limit=4
    $region2: #{tpu_custom_call.1} parent=1 // loop_pre_header
      _
    $region3: #{tpu_custom_call.1} parent=1 // loop_header
      %s16 = sphi 0, %s20
      %p17 = scmp.ge.s32.totalorder %s16, 4
      %s26 = sphi 0, %s28
      %s29 = sphi 0, %s26
      %s30 = sphi 0, %s29
      %s46 = sphi 0, %s30
      %s50 = sphi 0, %s50
      %s52 = sphi 0, %s50
      %s53 = sphi 0, %s52
      %s67 = sphi 0, %s53
      %s71 = sphi 0, %s71
      %s73 = sphi 0, %s71
      %s74 = sphi 0, %s73
      %s88 = sphi 0, %s74
      %s92 = sphi 0, %s92
      %s94 = sphi 0, %s92
      %s95 = sphi 0, %s94
      %s109 = sphi 0, %s95
      %s115 = sphi 0, %s117
      %s118 = sphi 0, %s115
      %s119 = sphi 0, %s118
      %s135 = sphi 0, %s119
    $region4: #{tpu_custom_call.1} parent=1 // loop_header_branch
      %19 = sbr.rel (%p17) target = $region8
    $region5: #{tpu_custom_call.1} parent=1 // loop_body
      %s21 = ssub.s32 %s16, 1
      %s22 = ssub.s32 %s16, 2
      %s23 = sadd.s32 %s16, 1
      %s24 = ssub.s32 %s16, %s23
      %p25 = scmp.eq.s32.totalorder %s24, 0
      %s27 = sadd.s32 %s26, 1
      %s28 = scalar_select %p25, %s26, %s27
      %p31 = pneg %p25
      %p32 = scmp.eq.s32.totalorder %s16, 1
      %p33 = por %p31, %p32
      %p34 = scmp.ne.s32.totalorder %s26, %s29
      %p35 = scmp.eq.s32.totalorder %s16, 0
      %p36 = por %p34, %p35
      %p37 = scmp.ne.s32.totalorder %s26, %s29
      %p38 = scmp.eq.s32.totalorder %s21, 1
      %p39 = por %p37, %p38
      %p40 = scmp.ne.s32.totalorder %s29, %s30
      %p41 = scmp.eq.s32.totalorder %s21, 0
      %p42 = por %p40, %p41
      %p43 = scmp.ne.s32.totalorder %s29, %s30
      %p44 = scmp.eq.s32.totalorder %s22, 1
      %p45 = por %p43, %p44
      %p47 = scmp.ne.s32.totalorder %s30, %s46
      %p48 = scmp.eq.s32.totalorder %s22, 0
      %p49 = por %p47, %p48
      %s51 = sadd.s32 %s50, 1
      %p54 = scmp.eq.s32.totalorder %s16, 1
      %p55 = scmp.ne.s32.totalorder %s50, %s52
      %p56 = scmp.eq.s32.totalorder %s16, 0
      %p57 = por %p55, %p56
      %p58 = scmp.ne.s32.totalorder %s50, %s52
      %p59 = scmp.eq.s32.totalorder %s21, 1
      %p60 = por %p58, %p59
      %p61 = scmp.ne.s32.totalorder %s52, %s53
      %p62 = scmp.eq.s32.totalorder %s21, 0
      %p63 = por %p61, %p62
      %p64 = scmp.ne.s32.totalorder %s52, %s53
      %p65 = scmp.eq.s32.totalorder %s22, 1
      %p66 = por %p64, %p65
      %p68 = scmp.ne.s32.totalorder %s53, %s67
      %p69 = scmp.eq.s32.totalorder %s22, 0
      %p70 = por %p68, %p69
      %s72 = sadd.s32 %s71, 1
      %p75 = scmp.eq.s32.totalorder %s16, 1
      %p76 = scmp.ne.s32.totalorder %s71, %s73
      %p77 = scmp.eq.s32.totalorder %s16, 0
      %p78 = por %p76, %p77
      %p79 = scmp.ne.s32.totalorder %s71, %s73
      %p80 = scmp.eq.s32.totalorder %s21, 1
      %p81 = por %p79, %p80
      %p82 = scmp.ne.s32.totalorder %s73, %s74
      %p83 = scmp.eq.s32.totalorder %s21, 0
      %p84 = por %p82, %p83
      %p85 = scmp.ne.s32.totalorder %s73, %s74
      %p86 = scmp.eq.s32.totalorder %s22, 1
      %p87 = por %p85, %p86
      %p89 = scmp.ne.s32.totalorder %s74, %s88
      %p90 = scmp.eq.s32.totalorder %s22, 0
      %p91 = por %p89, %p90
      %s93 = sadd.s32 %s92, 1
      %p96 = scmp.eq.s32.totalorder %s16, 1
      %p97 = scmp.ne.s32.totalorder %s92, %s94
      %p98 = scmp.eq.s32.totalorder %s16, 0
      %p99 = por %p97, %p98
      %p100 = scmp.ne.s32.totalorder %s92, %s94
      %p101 = scmp.eq.s32.totalorder %s21, 1
      %p102 = por %p100, %p101
      %p103 = scmp.ne.s32.totalorder %s94, %s95
      %p104 = scmp.eq.s32.totalorder %s21, 0
      %p105 = por %p103, %p104
      %p106 = scmp.ne.s32.totalorder %s94, %s95
      %p107 = scmp.eq.s32.totalorder %s22, 1
      %p108 = por %p106, %p107
      %p110 = scmp.ne.s32.totalorder %s95, %s109
      %p111 = scmp.eq.s32.totalorder %s22, 0
      %p112 = por %p110, %p111
      %s113 = ssub.s32 %s16, %s23
      %p114 = scmp.eq.s32.totalorder %s113, 0
      %s116 = sadd.s32 %s115, 1
      %s117 = scalar_select %p114, %s115, %s116
      %p120 = pneg %p114
      %p121 = scmp.eq.s32.totalorder %s16, 1
      %p122 = por %p120, %p121
      %p123 = scmp.ne.s32.totalorder %s115, %s118
      %p124 = scmp.eq.s32.totalorder %s16, 0
      %p125 = por %p123, %p124
      %p126 = scmp.ne.s32.totalorder %s115, %s118
      %p127 = scmp.eq.s32.totalorder %s21, 1
      %p128 = por %p126, %p127
      %p129 = scmp.ne.s32.totalorder %s118, %s119
      %p130 = scmp.eq.s32.totalorder %s21, 0
      %p131 = por %p129, %p130
      %p132 = scmp.ne.s32.totalorder %s118, %s119
      %p133 = scmp.eq.s32.totalorder %s22, 1
      %p134 = por %p132, %p133
      %p136 = scmp.ne.s32.totalorder %s119, %s135
      %p137 = scmp.eq.s32.totalorder %s22, 0
      %p138 = por %p136, %p137
      %p139 = scmp.le.s32.totalorder 1, %s16
      %p140 = scmp.lt.s32.totalorder %s16, 3
      %p141 = pnand %p139, %p140
      %p142 = pneg %p141
      // Predicated region
      $region9: #{tpu_custom_call.1} parent=5 // pred_check
        _
      $region10: #{tpu_custom_call.1} parent=5 // pred_check_branch
        %144 = sbr.rel (%p141) target = $region12
      $region11: #{tpu_custom_call.1} parent=5 // pred_region
        %s145 = ssub.s32 %s16, 1
        // Predicated region
        $region13: #{tpu_custom_call.1} parent=11 // pred_check
          %p146 = pneg %p63
        $region14: #{tpu_custom_call.1} parent=11 // pred_check_branch
          %148 = sbr.rel (%p146) target = $region16
        $region15: #{tpu_custom_call.1} parent=11 // pred_region
          _
        $region16: #{tpu_custom_call.1} parent=11 // pred_fallthru
          _
        // Predicated region
        $region17: #{tpu_custom_call.1} parent=11 // pred_check
          %p149 = pneg %p84
        $region18: #{tpu_custom_call.1} parent=11 // pred_check_branch
          %151 = sbr.rel (%p149) target = $region20
        $region19: #{tpu_custom_call.1} parent=11 // pred_region
          _
        $region20: #{tpu_custom_call.1} parent=11 // pred_fallthru
          _
        // Predicated region
        $region21: #{tpu_custom_call.1} parent=11 // pred_check
          %p152 = pneg %p105
        $region22: #{tpu_custom_call.1} parent=11 // pred_check_branch
          %154 = sbr.rel (%p152) target = $region24
        $region23: #{tpu_custom_call.1} parent=11 // pred_region
          _
        $region24: #{tpu_custom_call.1} parent=11 // pred_fallthru
          _
      $region12: #{tpu_custom_call.1} parent=5 // pred_fallthru
        _
      %p155 = scmp.lt.s32.totalorder %s16, 2
      // Predicated region
      $region25: #{tpu_custom_call.1} parent=5 // pred_check
        %p156 = pneg %p155
      $region26: #{tpu_custom_call.1} parent=5 // pred_check_branch
        %158 = sbr.rel (%p156) target = $region28
      $region27: #{tpu_custom_call.1} parent=5 // pred_region
        // Predicated region
        $region29: #{tpu_custom_call.1} parent=27 // pred_check
          %p159 = pneg %p36
        $region30: #{tpu_custom_call.1} parent=27 // pred_check_branch
          %161 = sbr.rel (%p159) target = $region32
        $region31: #{tpu_custom_call.1} parent=27 // pred_region
          %s162 = sand.u32 %s26, 1
          %s163 = scalar_lea.sflag [#allocation4], %s162
          %s164 = sand.u32 %s26, 1
          %s165 = smul.addr %s164, 16
          %s166 = scalar_lea.vmem [#allocation3], %s165
          %168 = vsyncadd %s163, 0
          %s169 = smul.addr %s16, 4
          %s170 = smul.addr %s169, 4
          %s171 = scalar_lea.hbm %s0, %s170
          %s172 = sshll.u32 %s171, 4
          %s173 = int_to_ptr.hbm [resolvable:$true] %s172
          %s174 = sshll.u32 %s166, 4
          %s175 = int_to_ptr.vmem [resolvable:$true] %s174
          %180 = dma.hbm_to_vmem [thread:$0]  %s173, 256, %s175, %s163, 64, 64, 4
        $region32: #{tpu_custom_call.1} parent=27 // pred_fallthru
          _
      $region28: #{tpu_custom_call.1} parent=5 // pred_fallthru
        _
      %p181 = scmp.le.s32.totalorder 1, %s16
      %p182 = scmp.lt.s32.totalorder %s16, 3
      %p183 = pnand %p181, %p182
      %p184 = pneg %p183
      // Predicated region
      $region33: #{tpu_custom_call.1} parent=5 // pred_check
        _
      $region34: #{tpu_custom_call.1} parent=5 // pred_check_branch
        %186 = sbr.rel (%p183) target = $region36
      $region35: #{tpu_custom_call.1} parent=5 // pred_region
        %s187 = ssub.s32 %s16, 1
        %s188 = sand.u32 %s29, 1
        %s189 = scalar_lea.sflag [#allocation4], %s188
        %s190 = sand.u32 %s29, 1
        %s191 = smul.addr %s190, 16
        %s192 = scalar_lea.vmem [#allocation3], %s191
        // Predicated region
        $region37: #{tpu_custom_call.1} parent=35 // pred_check
          %p193 = pneg %p42
        $region38: #{tpu_custom_call.1} parent=35 // pred_check_branch
          %195 = sbr.rel (%p193) target = $region40
        $region39: #{tpu_custom_call.1} parent=35 // pred_region
          %197 = dma.done %s189, 256
        $region40: #{tpu_custom_call.1} parent=35 // pred_fallthru
          _
        %s198 = sand.u32 %s29, 1
        %s199 = scalar_lea.sflag [#allocation4], %s198
        %s200 = sand.u32 %s29, 1
        %s201 = smul.addr %s200, 16
        %s202 = scalar_lea.vmem [#allocation3], %s201
        %p203 = pneg %p42
        %p204 = pneg %p39
        %p205 = pneg %p63
        %p206 = pneg %p60
        %p207 = pneg %p84
        %p208 = pneg %p81
        %p209 = pneg %p105
        %p210 = pneg %p102
        %p211 = pneg %p131
        %p212 = pneg %p128
        %s213 = sand.u32 %s118, 1
        %s214 = scalar_lea.sflag [#allocation5], %s213
        %s215 = sand.u32 %s118, 1
        %s216 = smul.addr %s215, 8
        %s217 = scalar_lea.vmem [#allocation6], %s216
        %v218 = vld [vmem:[%s192] sm:$0xf]
        %vm219 = vcmask 584704
        %220 = vst.msk [vmem:[#allocation2] sm:$0xf] %vm219, %v218
        %s221 = scalar_lea.vmem %s192, 4 [#allocation3]
        %v222 = vld [vmem:[%s221] sm:$0xf]
        %223 = vst.msk [vmem:[#allocation2 + $0x4] sm:$0xf] %vm219, %v222
        %v224 = vld [vmem:[%s192] sm:$0xf]
        %226 = vrot.lane.b32.xlu0 %v224, 127
        %v227 = vpop.permute.xlu0 %226
        %229 = vst.msk [vmem:[#allocation2 + $0x8] sm:$0xf] %vm219, %v227
        %s230 = scalar_lea.vmem %s192, 8 [#allocation3]
        %v231 = vld [vmem:[%s230] sm:$0xf]
        %232 = vst.msk [vmem:[#allocation2 + $0xc] sm:$0xf] %vm219, %v231
        %s233 = scalar_lea.vmem %s192, 12 [#allocation3]
        %v234 = vld [vmem:[%s233] sm:$0xf]
        %235 = vst.msk [vmem:[#allocation2 + $0x10] sm:$0xf] %vm219, %v234
        %v236 = vld [vmem:[%s230] sm:$0xf]
        %238 = vrot.lane.b32.xlu0 %v236, 127
        %v239 = vpop.permute.xlu0 %238
        %241 = vst.msk [vmem:[#allocation2 + $0x14] sm:$0xf] %vm219, %v239
        %v242 = vld [vmem:[%s192] sm:$0xf]
        %244 = vrot.lane.b32.xlu0 %v242, 119
        %v245 = vpop.permute.xlu0 %244
        %247 = vst.msk [vmem:[#allocation2 + $0x18] sm:$0xf] %vm219, %v245
        %v248 = vld [vmem:[%s221] sm:$0xf]
        %250 = vrot.lane.b32.xlu0 %v248, 119
        %v251 = vpop.permute.xlu0 %250
        %253 = vst.msk [vmem:[#allocation2 + $0x1c] sm:$0xf] %vm219, %v251
        %v254 = vld [vmem:[%s192] sm:$0xf]
        %256 = vrot.lane.b32.xlu0 %v254, 118
        %v257 = vpop.permute.xlu0 %256
        %259 = vst.msk [vmem:[#allocation2 + $0x20] sm:$0xf] %vm219, %v257
        %v260 = vld [vmem:[%s1] sm:$0xff]
        %v261 = vld [vmem:[#allocation2] sm:$0xff]
        %v262 = vld [vmem:[#allocation2 + $0x8] sm:$0xff]
        %v263 = vld [vmem:[#allocation2 + $0x10] sm:$0xff]
        %v264 = vld [vmem:[#allocation2 + $0x18] sm:$0xff]
        %v265 = vld [vmem:[#allocation2 + $0x20] sm:$0xf]
        %vm266 = vcmask 293888
        %v268 = vsel %vm266, %v260, 0
        %vm270 = vcmask 1043456
        %v272 = vsel %vm270, %v265, 0
        %274 = vmatpush.msra.mxu0 0.0
        %275 = vmatpush.msra.mxu0 0.0
        %276 = vmatpush.msra.mxu0 0.0
        %277 = vmatpush.msra.mxu0 0.0
        %278 = vmatpush.msra.mxu0 0.0
        %279 = vmatpush.msra.mxu0 0.0
        %280 = vmatpush.msra.mxu0 0.0
        %281 = vmatpush.msra.mxu0 0.0
        %282 = vmatpush.msra.mxu0 0.0
        %283 = vmatpush.msra.mxu0 0.0
        %284 = vmatpush.msra.mxu0 0.0
        %285 = vmatpush.msra.mxu0 %v272
        %286 = vmatpush.msra.mxu0 %v264
        %287 = vmatpush.msra.mxu0 %v263
        %288 = vmatpush.msra.mxu0 %v262
        %289 = vmatpush.msra.mxu0 %v261
        %290 = vmatmul.f32.gmra.mxu0 %v268
        %v291 = vpop.f32.mrf.mxu0
        %v292 = vadd.f32 0.0, %v291
        %293 = vdwg.mxu0
        %v294 = vld [vmem:[%s2] sm:$0xff]
        %296 = vset.pattern.permute.xlu0 0
        %297 = vperm.xlu0 %296, %v294
        %v298 = vpop.permute.xlu0 %297
        %v300 = vmul.f32 %v292, %v298
        %v301 = vld [vmem:[%s3] sm:$0xff]
        %303 = vset.pattern.permute.xlu0 0
        %304 = vperm.xlu0 %303, %v301
        %v305 = vpop.permute.xlu0 %304
        %v307 = vadd.f32 %v300, %v305
        %vm308 = vcmask 588800
        %309 = vst.msk [vmem:[%s217] sm:$0xff] %vm308, %v307
        %s310 = sand.u32 %s118, 1
        %s311 = scalar_lea.sflag [#allocation5], %s310
        %s312 = sand.u32 %s118, 1
        %s313 = smul.addr %s312, 8
        %s314 = scalar_lea.vmem [#allocation6], %s313
        // Predicated region
        $region41: #{tpu_custom_call.1} parent=35 // pred_check
          %p315 = pneg %p128
        $region42: #{tpu_custom_call.1} parent=35 // pred_check_branch
          %317 = sbr.rel (%p315) target = $region44
        $region43: #{tpu_custom_call.1} parent=35 // pred_region
          %319 = vsyncadd %s311, 0
          %s320 = smul.addr %s21, 8
          %s321 = scalar_lea.hbm %s4, %s320
          %s323 = sshll.u32 %s314, 4
          %s324 = int_to_ptr.vmem [resolvable:$true] %s323
          %s325 = sshll.u32 %s321, 4
          %s326 = int_to_ptr.hbm [resolvable:$true] %s325
          %328 = dma.vmem_to_hbm [thread:$0]  %s324, 128, %s326, %s311
        $region44: #{tpu_custom_call.1} parent=35 // pred_fallthru
          _
      $region36: #{tpu_custom_call.1} parent=5 // pred_fallthru
        _
      %p329 = scmp.le.s32.totalorder 2, %s16
      // Predicated region
      $region45: #{tpu_custom_call.1} parent=5 // pred_check
        %p330 = pneg %p329
      $region46: #{tpu_custom_call.1} parent=5 // pred_check_branch
        %332 = sbr.rel (%p330) target = $region48
      $region47: #{tpu_custom_call.1} parent=5 // pred_region
        %s333 = ssub.s32 %s16, 2
        // Predicated region
        $region49: #{tpu_custom_call.1} parent=47 // pred_check
          %p334 = pneg %p134
        $region50: #{tpu_custom_call.1} parent=47 // pred_check_branch
          %336 = sbr.rel (%p334) target = $region52
        $region51: #{tpu_custom_call.1} parent=47 // pred_region
          %s337 = sand.u32 %s119, 1
          %s338 = scalar_lea.sflag [#allocation5], %s337
          %s339 = sand.u32 %s119, 1
          %s340 = smul.addr %s339, 8
          %s341 = scalar_lea.vmem [#allocation6], %s340
          %343 = dma.done %s338, 128
        $region52: #{tpu_custom_call.1} parent=47 // pred_fallthru
          _
      $region48: #{tpu_custom_call.1} parent=5 // pred_fallthru
        _
    $region6: #{tpu_custom_call.1} parent=1 // loop_footer
      %s20 = sadd.s32 1, %s16
    $region7: #{tpu_custom_call.1} parent=1 // loop_footer_branch
      %15 = sbr.rel target = $region3
    $region8: #{tpu_custom_call.1} parent=1 // loop_exit
      _
    %344 = vsyncpa [#allocation4], 1
    %s345 = scalar_lea.sflag [#allocation4], 1
    %346 = vsyncpa %s345, 1
    %347 = vsyncpa [#allocation5], 1
    %s348 = scalar_lea.sflag [#allocation5], 1
    %349 = vsyncpa %s348, 1

</llo_original>
